<compile_context>
chip_gen: v5e
topology: v5e:2x2
jax: 0.10.0
libtpu: 0.0.40
codegen_flags: <defaults>
</compile_context>

<pallas_src>
import functools
import math

import numpy as np

import jax
import jax.numpy as jnp
from jax import lax
from jax.experimental import pallas as pl
from jax.experimental.pallas import tpu as pltpu


def _tv_kernel(x_ref, hm_ref, wm_ref, out_ref, *, W, CH, BC, T,
               need_row_mask, need_where):
    # x_ref : (T, CH)  -- T flattened images, CH = R*W lanes (R whole image rows).
    # hm_ref: (1, 1, CH - W) f32, == 1/count_h where the vertical diff is valid, else 0.
    # wm_ref: (1, 1, CH - 1) f32, == 1/count_w where the horizontal diff is valid, else 0.
    # out_ref: (1, 1, 8, 128) per-(row-block, chunk) pre-scaled partial sum.
    x = x_ref[...].astype(jnp.float32)

    if need_row_mask:
        # Ragged last row-block: zero rows past BC (select kills garbage NaN/Inf).
        row = pl.program_id(1) * T + lax.broadcasted_iota(jnp.int32, (T, 1), 0)
        x = jnp.where(row < BC, x, 0.0)

    dh = x[:, W:] - x[:, :CH - W]      # vertical neighbours  (flat offset +W)
    dw = x[:, 1:] - x[:, :CH - 1]      # horizontal neighbours (flat offset +1)

    hm = hm_ref[0]                     # (1, CH-W), broadcasts over rows
    wm = wm_ref[0]                     # (1, CH-1)
    if need_where:
        # Ragged last spatial chunk: garbage lanes -> use select so NaN*0 can't leak.
        ch = jnp.where(hm != 0.0, dh * dh * hm, 0.0)
        cw = jnp.where(wm != 0.0, dw * dw * wm, 0.0)
    else:
        ch = dh * dh * hm
        cw = dw * dw * wm

    total = jnp.sum(ch) + jnp.sum(cw)
    out_ref[...] = jnp.broadcast_to(total, (1, 1, 8, 128))


def _vmem_capacity_bytes():
    try:
        info = pltpu.get_tpu_info()
        cap = getattr(info, "vmem_capacity_bytes", None)
        if cap:
            return int(cap)
    except Exception:
        pass
    return 64 * 1024 * 1024  # conservative fallback (v7x per-core VMEM)


def l_tv(x, tv_loss_weight: float = 1.0):
    """Pallas equivalent of L_TV.forward(x) for NCHW input x (H, W >= 2)."""
    B, C, H, W = x.shape
    BC = B * C
    HW = H * W
    count_h = (H - 1) * W
    count_w = H * (W - 1)
    inv_ch = 1.0 / count_h
    inv_cw = 1.0 / count_w

    xf = x.reshape(BC, HW)

    # ---- generation-aware tile / VMEM sizing ---------------------------------
    vmem_cap = _vmem_capacity_bytes()
    big_vmem = vmem_cap >= 96 * 1024 * 1024           # v5e / v6e (128 MiB VMEM)
    target_tile_bytes = (8 if big_vmem else 3) * 1024 * 1024
    vmem_limit = (80 if big_vmem else 48) * 1024 * 1024
    budget_elems = target_tile_bytes // 4             # f32 working elements / block

    # ---- spatial (flattened HW) chunking: CH = R image rows, CH % 128 == 0 ---
    min_rows = min(BC, 8)
    if min_rows * HW <= budget_elems:
        R, CH, nc = H, HW, 1
    else:
        q = (W * 128) // math.gcd(W, 128)              # lcm(W, 128)
        lanes = max(q, (budget_elems // min_rows) // q * q)
        R = max(2, lanes // W)
        CH = R * W
        nc = pl.cdiv(H, R)
        if R >= H:                                     # degenerate -> no chunking
            R, CH, nc = H, HW, 1

    # ---- row blocking over the B*C axis ---------------------------------------
    budget_rows = max(8, (budget_elems // CH) // 8 * 8)
    T = BC if BC <= budget_rows else budget_rows       # full dim or multiple of 8
    nb = pl.cdiv(BC, T)
    need_row_mask = (BC % T) != 0                       # ragged last row-block
    need_where = (nc * CH) != HW                        # ragged last spatial chunk

    # ---- precomputed validity masks (1/count scaling folded in) --------------
    g = np.arange(nc * CH, dtype=np.int64).reshape(nc, CH)  # global flat index
    gh = g[:, : CH - W]
    gw = g[:, : CH - 1]
    hmask = np.where(gh + W < HW, inv_ch, 0.0).astype(np.float32)
    wmask = np.where((gw < HW) & (gw % W != W - 1), inv_cw, 0.0).astype(np.float32)
    hmask = jnp.asarray(hmask.reshape(nc, 1, CH - W))
    wmask = jnp.asarray(wmask.reshape(nc, 1, CH - 1))

    kernel = functools.partial(
        _tv_kernel, W=W, CH=CH, BC=BC, T=T,
        need_row_mask=need_row_mask, need_where=need_where)

    flops = int(8 * BC * HW)
    bytes_accessed = int(BC * HW * x.dtype.itemsize
                         + nb * 2 * CH * 4
                         + nb * nc * 8 * 128 * 4)

    partials = pl.pallas_call(
        kernel,
        out_shape=jax.ShapeDtypeStruct((nb, nc, 8, 128), jnp.float32),
        grid_spec=pltpu.PrefetchScalarGridSpec(
            num_scalar_prefetch=0,
            # Row blocks innermost -> the chunk's masks stay resident in VMEM.
            grid=(nc, nb),
            in_specs=[
                pl.BlockSpec((T, CH), lambda j, i: (i, j)),
                pl.BlockSpec((1, 1, CH - W), lambda j, i: (j, 0, 0)),
                pl.BlockSpec((1, 1, CH - 1), lambda j, i: (j, 0, 0)),
            ],
            out_specs=pl.BlockSpec((1, 1, 8, 128), lambda j, i: (i, j, 0, 0)),
        ),
        compiler_params=pltpu.CompilerParams(
            # Each block writes its own partial -> no cross-step accumulator ->
            # both grid axes are safely parallel (uses both TCs on v7x).
            dimension_semantics=("parallel", "parallel"),
            vmem_limit_bytes=vmem_limit,
        ),
        cost_estimate=pl.CostEstimate(
            flops=flops, transcendentals=0, bytes_accessed=bytes_accessed),
    )(xf, hmask, wmask)

    total = jnp.sum(partials[:, :, 0, 0])

    # h-differences that straddle chunk boundaries (image rows R, 2R, ...).
    if nc > 1:
        bnd = np.arange(R, H, R)
        if bnd.size:
            d = (x[:, :, bnd, :].astype(jnp.float32)
                 - x[:, :, bnd - 1, :].astype(jnp.float32))
            total = total + jnp.sum(d * d) * inv_ch

    return tv_loss_weight * 2.0 * total / B


def _l_tv_ref(x, tv_loss_weight: float = 1.0):
    # Pure-JAX reference mirroring the PyTorch forward, for a sanity check.
    B, C, H, W = x.shape
    h_tv = jnp.sum((x[:, :, 1:, :] - x[:, :, : H - 1, :]) ** 2)
    w_tv = jnp.sum((x[:, :, :, 1:] - x[:, :, :, : W - 1]) ** 2)
    count_h = (H - 1) * W
    count_w = H * (W - 1)
    return tv_loss_weight * 2.0 * (h_tv / count_h + w_tv / count_w) / B


if __name__ == "__main__":
    key = jax.random.PRNGKey(0)
    x = jax.random.normal(key, (2, 4, 16, 16), dtype=jnp.float32)  # NCHW

    out = jax.block_until_ready(l_tv(x, tv_loss_weight=1.0))
    ref = jax.block_until_ready(_l_tv_ref(x, tv_loss_weight=1.0))

    assert jnp.allclose(out, ref, rtol=1e-5, atol=1e-5), (out, ref)
    print("KERNEL_OK")
</pallas_src>

<mosaic_0001>
module attributes {stable_mosaic.version = 11 : i64} {
  func.func @_tv_kernel(%arg0: i32, %arg1: i32, %arg2: memref<8x256xf32, #tpu.memory_space<vmem>>, %arg3: memref<1x1x240xf32, #tpu.memory_space<vmem>>, %arg4: memref<1x1x255xf32, #tpu.memory_space<vmem>>, %arg5: memref<1x1x8x128xf32, #tpu.memory_space<vmem>>) attributes {dimension_semantics = [#tpu.dimension_semantics<parallel>, #tpu.dimension_semantics<parallel>], iteration_bounds = array<i64: 1, 1>, scalar_prefetch = 0 : i64, scratch_operands = 0 : i64, tpu.core_type = #tpu.core_type<tc>, window_params = [{transform_indices = @transform_0, window_bounds = array<i64: 8, 256>}, {transform_indices = @transform_1, window_bounds = array<i64: 1, 1, 240>}, {transform_indices = @transform_2, window_bounds = array<i64: 1, 1, 255>}, {transform_indices = @transform_3, window_bounds = array<i64: 1, 1, 8, 128>}]} {
    %c0 = arith.constant 0 : index
    %c0_0 = arith.constant 0 : index
    %0 = vector.load %arg2[%c0, %c0_0] : memref<8x256xf32, #tpu.memory_space<vmem>>, vector<8x256xf32>
    %1 = vector.extract_strided_slice %0 {offsets = [0, 16], sizes = [8, 240], strides = [1, 1]} : vector<8x256xf32> to vector<8x240xf32>
    %2 = vector.extract_strided_slice %0 {offsets = [0, 0], sizes = [8, 240], strides = [1, 1]} : vector<8x256xf32> to vector<8x240xf32>
    %3 = arith.subf %1, %2 : vector<8x240xf32>
    %4 = vector.extract_strided_slice %0 {offsets = [0, 1], sizes = [8, 255], strides = [1, 1]} : vector<8x256xf32> to vector<8x255xf32>
    %5 = vector.extract_strided_slice %0 {offsets = [0, 0], sizes = [8, 255], strides = [1, 1]} : vector<8x256xf32> to vector<8x255xf32>
    %6 = arith.subf %4, %5 : vector<8x255xf32>
    %c0_1 = arith.constant 0 : index
    %c0_2 = arith.constant 0 : index
    %c0_3 = arith.constant 0 : index
    %7 = vector.load %arg3[%c0_1, %c0_2, %c0_3] : memref<1x1x240xf32, #tpu.memory_space<vmem>>, vector<1x1x240xf32>
    %8 = vector.shape_cast %7 : vector<1x1x240xf32> to vector<1x240xf32>
    %c0_4 = arith.constant 0 : index
    %c0_5 = arith.constant 0 : index
    %c0_6 = arith.constant 0 : index
    %9 = vector.load %arg4[%c0_4, %c0_5, %c0_6] : memref<1x1x255xf32, #tpu.memory_space<vmem>>, vector<1x1x255xf32>
    %10 = vector.shape_cast %9 : vector<1x1x255xf32> to vector<1x255xf32>
    %11 = arith.mulf %3, %3 : vector<8x240xf32>
    %12 = vector.broadcast %8 : vector<1x240xf32> to vector<8x240xf32>
    %13 = arith.mulf %11, %12 : vector<8x240xf32>
    %14 = arith.mulf %6, %6 : vector<8x255xf32>
    %15 = vector.broadcast %10 : vector<1x255xf32> to vector<8x255xf32>
    %16 = arith.mulf %14, %15 : vector<8x255xf32>
    %17 = vector.shape_cast %13 : vector<8x240xf32> to vector<1x8x240xf32>
    %cst = arith.constant dense<0.000000e+00> : vector<1xf32>
    %18 = vector.multi_reduction <add>, %17, %cst [1, 2] : vector<1x8x240xf32> to vector<1xf32>
    %19 = vector.shape_cast %18 : vector<1xf32> to vector<1x1x1xf32>
    %20 = vector.extract %19[0, 0, 0] : f32 from vector<1x1x1xf32>
    %21 = vector.shape_cast %16 : vector<8x255xf32> to vector<1x8x255xf32>
    %cst_7 = arith.constant dense<0.000000e+00> : vector<1xf32>
    %22 = vector.multi_reduction <add>, %21, %cst_7 [1, 2] : vector<1x8x255xf32> to vector<1xf32>
    %23 = vector.shape_cast %22 : vector<1xf32> to vector<1x1x1xf32>
    %24 = vector.extract %23[0, 0, 0] : f32 from vector<1x1x1xf32>
    %25 = arith.addf %20, %24 : f32
    %26 = vector.broadcast %25 : f32 to vector<1x1x8x128xf32>
    %c0_8 = arith.constant 0 : index
    %c0_9 = arith.constant 0 : index
    %c0_10 = arith.constant 0 : index
    %c0_11 = arith.constant 0 : index
    %27 = vector.load %arg5[%c0_8, %c0_9, %c0_10, %c0_11] : memref<1x1x8x128xf32, #tpu.memory_space<vmem>>, vector<1x1x8x128xf32>
    tpu.vector_store %arg5[%c0_8, %c0_9, %c0_10, %c0_11], %26 {strides = array<i32>} : memref<1x1x8x128xf32, #tpu.memory_space<vmem>>, vector<1x1x8x128xf32>,
    return
  }
  func.func @transform_0(%arg0: i32, %arg1: i32) -> (i32, i32) {
    %c0_i32 = arith.constant 0 : i32
    return %arg1, %arg0 : i32, i32
  }
  func.func @transform_1(%arg0: i32, %arg1: i32) -> (i32, i32, i32) {
    %c0_i32 = arith.constant 0 : i32
    %c0_i32_0 = arith.constant 0 : i32
    %c0_i32_1 = arith.constant 0 : i32
    return %arg0, %c0_i32, %c0_i32_0 : i32, i32, i32
  }
  func.func @transform_2(%arg0: i32, %arg1: i32) -> (i32, i32, i32) {
    %c0_i32 = arith.constant 0 : i32
    %c0_i32_0 = arith.constant 0 : i32
    %c0_i32_1 = arith.constant 0 : i32
    return %arg0, %c0_i32, %c0_i32_0 : i32, i32, i32
  }
  func.func @transform_3(%arg0: i32, %arg1: i32) -> (i32, i32, i32, i32) {
    %c0_i32 = arith.constant 0 : i32
    %c0_i32_0 = arith.constant 0 : i32
    %c0_i32_1 = arith.constant 0 : i32
    return %arg1, %arg0, %c0_i32, %c0_i32_0 : i32, i32, i32, i32
  }
}

</mosaic_0001>

<llo_original>
// kernel: tpu_custom_call.1
$region0: #{tpu_custom_call.1}
  #allocation0 [shape = 'u32[]', space=smem, size = 0x4, offset = 0x4, fixed_abs, tag = 'smem constant byte address 0x4 - core index']
  #allocation1 [shape = 'u32[72,128]{1,0:T(1,128)}', space=vmem, size = 0x9000, scoped, tag = 'internal scratch']
  %s0 = inlined_call_operand.hbm [shape: f32[8,256], index: 0, kind: input, shape index: {}]
  %s1 = inlined_call_operand.hbm [shape: f32[1,1,240], index: 1, kind: input, shape index: {}]
  %s2 = inlined_call_operand.hbm [shape: f32[1,1,255], index: 2, kind: input, shape index: {}]
  %s3 = inlined_call_operand.hbm [shape: f32[1,1,8,128], index: 3, kind: output, shape index: {}]
  %s4 = sld [smem:[#allocation0]]
  $region34: #{tpu_custom_call.1} parent=0
    _
  %s6 = ssub.s32 1, %s4
  %s7 = scalar_select 0, %s6, %s4
  $region1: #{tpu_custom_call.1} parent=0
    #allocation2 [shape = 'u8[8192]{0}', space=vmem, size = 0x2000, scoped, tag = 'input window, operand 0, single buffered']
    #allocation3 [shape = 's32[1]{0}', space=sflag, size = 0x4, scoped, tag = 'scoped memory for tpu_custom_call.1']
    #allocation4 [shape = 's32[1]{0}', space=sflag, size = 0x4, scoped, tag = 'scoped memory for tpu_custom_call.1']
    #allocation5 [shape = 'u8[1024]{0}', space=vmem, size = 0x400, scoped, tag = 'input window, operand 1, single buffered']
    #allocation6 [shape = 's32[1]{0}', space=sflag, size = 0x4, scoped, tag = 'scoped memory for tpu_custom_call.1']
    #allocation7 [shape = 'u8[1024]{0}', space=vmem, size = 0x400, scoped, tag = 'input window, operand 2, single buffered']
    #allocation8 [shape = 'u8[4096]{0}', space=vmem, size = 0x1000, scoped, tag = 'output window, operand 0, single buffered']
    %8 = vsyncpa [#allocation3], 0
    %9 = vsyncpa [#allocation6], 0
    %10 = vsyncpa [#allocation4], 0
    // Predicated region
    $region2: #{tpu_custom_call.1} parent=1 // pred_check
      _
    $region3: #{tpu_custom_call.1} parent=1 // pred_check_branch
      %12 = sbr.rel (0) target = $region5
    $region4: #{tpu_custom_call.1} parent=1 // pred_region
      %14 = vsyncadd [#allocation3], 0
      %s16 = sshll.u32 %s0, 4
      %s17 = int_to_ptr.hbm [resolvable:$true] %s16
      %s18 = sshll.u32 [#allocation2], 4
      %s19 = int_to_ptr.vmem [resolvable:$true] %s18
      %21 = dma.hbm_to_vmem [thread:$0]  %s17, 256, %s19, [#allocation3]
    $region5: #{tpu_custom_call.1} parent=1 // pred_fallthru
      _
    // Predicated region
    $region6: #{tpu_custom_call.1} parent=1 // pred_check
      _
    $region7: #{tpu_custom_call.1} parent=1 // pred_check_branch
      %23 = sbr.rel (0) target = $region9
    $region8: #{tpu_custom_call.1} parent=1 // pred_region
      %25 = vsyncadd [#allocation6], 0
      %s27 = sshll.u32 %s1, 4
      %s28 = int_to_ptr.hbm [resolvable:$true] %s27
      %s29 = sshll.u32 [#allocation5], 4
      %s30 = int_to_ptr.vmem [resolvable:$true] %s29
      %32 = dma.hbm_to_vmem [thread:$0]  %s28, 32, %s30, [#allocation6]
    $region9: #{tpu_custom_call.1} parent=1 // pred_fallthru
      _
    // Predicated region
    $region10: #{tpu_custom_call.1} parent=1 // pred_check
      _
    $region11: #{tpu_custom_call.1} parent=1 // pred_check_branch
      %34 = sbr.rel (0) target = $region13
    $region12: #{tpu_custom_call.1} parent=1 // pred_region
      %36 = vsyncadd [#allocation6], 0
      %s38 = sshll.u32 %s2, 4
      %s39 = int_to_ptr.hbm [resolvable:$true] %s38
      %s40 = sshll.u32 [#allocation7], 4
      %s41 = int_to_ptr.vmem [resolvable:$true] %s40
      %43 = dma.hbm_to_vmem [thread:$0]  %s39, 32, %s41, [#allocation6]
    $region13: #{tpu_custom_call.1} parent=1 // pred_fallthru
      _
    // Predicated region
    $region14: #{tpu_custom_call.1} parent=1 // pred_check
      _
    $region15: #{tpu_custom_call.1} parent=1 // pred_check_branch
      %45 = sbr.rel (0) target = $region17
    $region16: #{tpu_custom_call.1} parent=1 // pred_region
      %47 = dma.done [#allocation3], 256
    $region17: #{tpu_custom_call.1} parent=1 // pred_fallthru
      _
    // Predicated region
    $region18: #{tpu_custom_call.1} parent=1 // pred_check
      _
    $region19: #{tpu_custom_call.1} parent=1 // pred_check_branch
      %49 = sbr.rel (0) target = $region21
    $region20: #{tpu_custom_call.1} parent=1 // pred_region
      %51 = dma.done [#allocation6], 32
    $region21: #{tpu_custom_call.1} parent=1 // pred_fallthru
      _
    // Predicated region
    $region22: #{tpu_custom_call.1} parent=1 // pred_check
      _
    $region23: #{tpu_custom_call.1} parent=1 // pred_check_branch
      %53 = sbr.rel (0) target = $region25
    $region24: #{tpu_custom_call.1} parent=1 // pred_region
      %55 = dma.done [#allocation6], 32
    $region25: #{tpu_custom_call.1} parent=1 // pred_fallthru
      _
    %v56 = vld [vmem:[#allocation2] sm:$0xff]
    %v57 = vld [vmem:[#allocation2 + $0x8] sm:$0xff]
    %60 = vrot.lane.b32.xlu0 %v56, 16
    %v61 = vpop.permute.xlu0 %60
    %62 = vrot.lane.b32.xlu0 %v57, 16
    %v63 = vpop.permute.xlu0 %62
    %vm64 = vcmask 130048
    %v65 = vsel %vm64, %v61, %v63
    %v68 = vsub.f32 %v56, %v61
    %v69 = vsub.f32 %v57, %v65
    %70 = vrot.lane.b32.xlu0 %v56, 1
    %v71 = vpop.permute.xlu0 %70
    %72 = vrot.lane.b32.xlu0 %v57, 1
    %v73 = vpop.permute.xlu0 %72
    %vm74 = vcmask 7168
    %v75 = vsel %vm74, %v71, %v73
    %v78 = vsub.f32 %v56, %v71
    %v79 = vsub.f32 %v57, %v75
    %v80 = vld [vmem:[#allocation5] sm:$0x3]
    %v81 = vld [vmem:[#allocation7] sm:$0x3]
    %v82 = vmul.f32 %v68, %v68
    %v83 = vmul.f32 %v69, %v69
    %v85 = vperm.slane %v80, 0
    %v86 = vperm.slane %v80, 1
    %87 = vrot.lane.b32.xlu0 %v85, 16
    %v88 = vpop.permute.xlu0 %87
    %89 = vrot.lane.b32.xlu0 %v86, 16
    %v90 = vpop.permute.xlu0 %89
    %v91 = vsel %vm64, %v88, %v90
    %v94 = vmul.f32 %v82, %v88
    %v95 = vmul.f32 %v83, %v91
    %v96 = vmul.f32 %v78, %v78
    %v97 = vmul.f32 %v79, %v79
    %v99 = vperm.slane %v81, 0
    %v100 = vperm.slane %v81, 1
    %101 = vrot.lane.b32.xlu0 %v99, 1
    %v102 = vpop.permute.xlu0 %101
    %103 = vrot.lane.b32.xlu0 %v100, 1
    %v104 = vpop.permute.xlu0 %103
    %v105 = vsel %vm74, %v102, %v104
    %v108 = vmul.f32 %v96, %v102
    %v109 = vmul.f32 %v97, %v105
    %112 = vrot.lane.b32.xlu0 %v94, 112
    %v113 = vpop.permute.xlu0 %112
    %114 = vrot.lane.b32.xlu0 %v95, 112
    %v115 = vpop.permute.xlu0 %114
    %vm116 = vcmask 916480
    %v117 = vsel %vm116, %v113, %v115
    %v120 = vsel %vm116, %v115, 0.0
    %v121 = vadd.f32 %v117, %v120
    %122 = vadd.xlane.f32.xlu0 %v121
    %v123 = vpop.xlane.xlu0 %122
    %v124 = vrot.slane %v123, 4
    %v125 = vadd.f32 %v123, %v124
    %v126 = vrot.slane %v125, 2
    %v127 = vadd.f32 %v125, %v126
    %v128 = vrot.slane %v127, 1
    %v129 = vadd.f32 %v127, %v128
    %s130 = vtos %v129
    %133 = vrot.lane.b32.xlu0 %v108, 127
    %v134 = vpop.permute.xlu0 %133
    %135 = vrot.lane.b32.xlu0 %v109, 127
    %v136 = vpop.permute.xlu0 %135
    %vm137 = vcmask 1039360
    %v138 = vsel %vm137, %v134, %v136
    %v141 = vsel %vm137, %v136, 0.0
    %v142 = vadd.f32 %v138, %v141
    %143 = vadd.xlane.f32.xlu0 %v142
    %v144 = vpop.xlane.xlu0 %143
    %v145 = vrot.slane %v144, 4
    %v146 = vadd.f32 %v144, %v145
    %v147 = vrot.slane %v146, 2
    %v148 = vadd.f32 %v146, %v147
    %v149 = vrot.slane %v148, 1
    %v150 = vadd.f32 %v148, %v149
    %s151 = vtos %v150
    %s152 = sadd.f32 %s130, %s151
    %v153 = vstv %s152
    %154 = vst [vmem:[#allocation8] sm:$0xff] %v153
    // Predicated region
    $region26: #{tpu_custom_call.1} parent=1 // pred_check
      _
    $region27: #{tpu_custom_call.1} parent=1 // pred_check_branch
      %156 = sbr.rel (0) target = $region29
    $region28: #{tpu_custom_call.1} parent=1 // pred_region
      %158 = vsyncadd [#allocation4], 0
      %s160 = sshll.u32 [#allocation8], 4
      %s161 = int_to_ptr.vmem [resolvable:$true] %s160
      %s162 = sshll.u32 %s3, 4
      %s163 = int_to_ptr.hbm [resolvable:$true] %s162
      %165 = dma.vmem_to_hbm [thread:$0]  %s161, 128, %s163, [#allocation4]
    $region29: #{tpu_custom_call.1} parent=1 // pred_fallthru
      _
    // Predicated region
    $region30: #{tpu_custom_call.1} parent=1 // pred_check
      _
    $region31: #{tpu_custom_call.1} parent=1 // pred_check_branch
      %167 = sbr.rel (0) target = $region33
    $region32: #{tpu_custom_call.1} parent=1 // pred_region
      %169 = dma.done [#allocation4], 128
    $region33: #{tpu_custom_call.1} parent=1 // pred_fallthru
      _
    %170 = vsyncpa [#allocation3], 1
    %171 = vsyncpa [#allocation6], 1
    %172 = vsyncpa [#allocation4], 1

</llo_original>
